<compile_context>
chip_gen: v7x
topology: tpu7x:2x2x1
jax: 0.10.0
libtpu: 0.0.40
codegen_flags: <defaults>
</compile_context>

<pallas_src>
import math

import jax
import jax.numpy as jnp
from jax import lax
from jax.experimental import pallas as pl
from jax.experimental.pallas import tpu as pltpu


def _round_up(v, a):
    return ((v + a - 1) // a) * a


def arc_margin_forward(x, weight, label, *, s=30.0, m=0.5, easy_margin=False,
                       ls_eps=0.0, block_b=256, block_n=512,
                       mxu_dtype=jnp.bfloat16, out_dtype=jnp.float32,
                       vmem_limit_bytes=None):
    """ArcMarginProduct.forward(input, label) -> scaled logits (B, out_features)."""
    B, K = x.shape
    N, K2 = weight.shape
    assert K == K2, "in_features mismatch between x and weight"

    cos_m = math.cos(m)
    sin_m = math.sin(m)
    th = math.cos(math.pi - m)
    mm = math.sin(math.pi - m) * m

    # ---- pre-pass (hoisted out of the kernel): 1/||x|| per row, 1/||w|| per class.
    # Matches F.normalize's x / max(||x||, 1e-12)  (rsqrt(max(||x||^2, 1e-24))).
    x_f32 = x.astype(jnp.float32)
    w_f32 = weight.astype(jnp.float32)
    inv_x = lax.rsqrt(jnp.maximum(jnp.sum(x_f32 * x_f32, axis=-1, keepdims=True),
                                  1e-24)).astype(jnp.float32)              # (B, 1)
    inv_w = lax.rsqrt(jnp.maximum(jnp.sum(w_f32 * w_f32, axis=-1),
                                  1e-24)).astype(jnp.float32).reshape(1, N)  # (1, N)
    label2d = label.astype(jnp.int32).reshape(B, 1)

    # ---- MXU-dtype operands streamed straight from HBM (bf16 halves weight DMA).
    x_mx = x.astype(mxu_dtype)
    w_mx = weight.astype(mxu_dtype)

    # ---- tiling + padding (no silent full-dimension fallback).
    row_align = 16 if jnp.dtype(mxu_dtype).itemsize <= 2 else 8
    tb = max(row_align, min(_round_up(block_b, row_align), _round_up(B, row_align)))
    tn = max(128, min(_round_up(block_n, 128), _round_up(N, 128)))
    Bp = _round_up(B, tb)
    Np = _round_up(N, tn)
    if Bp != B:
        pad = Bp - B
        x_mx = jnp.pad(x_mx, ((0, pad), (0, 0)))
        inv_x = jnp.pad(inv_x, ((0, pad), (0, 0)))
        label2d = jnp.pad(label2d, ((0, pad), (0, 0)), constant_values=-1)
    if Np != N:
        pad = Np - N
        w_mx = jnp.pad(w_mx, ((0, pad), (0, 0)))
        inv_w = jnp.pad(inv_w, ((0, 0), (0, pad)))

    # N tiles OUTER, B tiles INNER: weight block index is constant along the inner
    # axis, so the (dominant) weight tile is fetched once and reused across B tiles.
    grid = (Np // tn, Bp // tb)

    def kernel(x_ref, w_ref, invx_ref, invw_ref, lbl_ref, o_ref):
        j = pl.program_id(0)                                 # N-tile index

        # Raw matmul on the MXU, contracting the last (lane) dim of BOTH operands
        # (NT form, no weight transpose); f32 accumulate.
        raw = lax.dot_general(
            x_ref[...], w_ref[...],
            dimension_numbers=(((1,), (1,)), ((), ())),
            preferred_element_type=jnp.float32)              # (tb, tn) f32

        # Fold both (precomputed) norms in after the matmul.
        cosine = raw * invx_ref[...] * invw_ref[...]         # (tb,1) and (1,tn) bcast

        # one-hot mask with a *global* column index (this tile starts at j*tn).
        col = lax.broadcasted_iota(jnp.int32, (tb, tn), 1) + j * tn
        hit = col == lbl_ref[...]                            # (tb, tn) bool

        if ls_eps == 0.0:
            # Fast path: the margin only touches the label column -> (tb, 1) math.
            cos_l = jnp.sum(jnp.where(hit, cosine, 0.0), axis=-1, keepdims=True)
            sin_l = jnp.sqrt(jnp.maximum(1.0 - cos_l * cos_l, 0.0))
            phi_l = cos_l * cos_m - sin_l * sin_m
            if easy_margin:
                phi_l = jnp.where(cos_l > 0.0, phi_l, cos_l)
            else:
                phi_l = jnp.where(cos_l > th, phi_l, cos_l - mm)
            out = s * (cosine + jnp.where(hit, phi_l - cos_l, 0.0))
        else:
            sine = jnp.sqrt(jnp.maximum(1.0 - cosine * cosine, 0.0))
            phi = cosine * cos_m - sine * sin_m
            if easy_margin:
                phi = jnp.where(cosine > 0.0, phi, cosine)
            else:
                phi = jnp.where(cosine > th, phi, cosine - mm)
            one_hot = hit.astype(jnp.float32)
            one_hot = (1.0 - ls_eps) * one_hot + ls_eps / N   # true class count
            out = (one_hot * phi + (1.0 - one_hot) * cosine) * s

        o_ref[...] = out.astype(o_ref.dtype)

    if vmem_limit_bytes is None:
        try:
            phys = pltpu.get_tpu_info().vmem_capacity_bytes
        except Exception:                                    # conservative fallback
            phys = 64 * 2**20
        mb = jnp.dtype(mxu_dtype).itemsize
        ob = jnp.dtype(out_dtype).itemsize
        tile_bytes = (2 * tb * K * mb            # x tile, double-buffered
                      + 2 * tn * K * mb          # weight tile, double-buffered
                      + 2 * tb * tn * ob         # output tile, double-buffered
                      + 2 * 2 * tb * 128 * 4     # inv_x + label (lane-padded)
                      + 2 * 8 * tn * 4)          # inv_w (sublane-padded)
        vmem_limit_bytes = int(min(int(0.6 * phys),
                                   max(16 * 2**20, 4 * tile_bytes)))

    out = pl.pallas_call(
        kernel,
        out_shape=jax.ShapeDtypeStruct((Bp, Np), out_dtype),
        grid=grid,
        in_specs=[
            pl.BlockSpec((tb, K), lambda j, i: (i, 0)),    # x tile (re-streamed, tiny)
            pl.BlockSpec((tn, K), lambda j, i: (j, 0)),    # weight tile (reused over i)
            pl.BlockSpec((tb, 1), lambda j, i: (i, 0)),    # 1/||x|| per row
            pl.BlockSpec((1, tn), lambda j, i: (0, j)),    # 1/||w|| per class (pre-pass)
            pl.BlockSpec((tb, 1), lambda j, i: (i, 0)),    # label per row
        ],
        out_specs=pl.BlockSpec((tb, tn), lambda j, i: (i, j)),
        compiler_params=pltpu.CompilerParams(
            dimension_semantics=("parallel", "parallel"),
            vmem_limit_bytes=vmem_limit_bytes,
        ),
    )(x_mx, w_mx, inv_x, inv_w, label2d)

    return out[:B, :N]


def _reference(x, weight, label, s=30.0, m=0.5, easy_margin=False, ls_eps=0.0):
    """Plain-JAX mirror of the PyTorch forward (f32)."""
    N = weight.shape[0]
    xn = x / jnp.maximum(jnp.linalg.norm(x, axis=1, keepdims=True), 1e-12)
    wn = weight / jnp.maximum(jnp.linalg.norm(weight, axis=1, keepdims=True), 1e-12)
    cos = xn @ wn.T
    sin = jnp.sqrt(jnp.maximum(1.0 - cos * cos, 0.0))
    phi = cos * math.cos(m) - sin * math.sin(m)
    if easy_margin:
        phi = jnp.where(cos > 0.0, phi, cos)
    else:
        phi = jnp.where(cos > math.cos(math.pi - m), phi, cos - math.sin(math.pi - m) * m)
    oh = jax.nn.one_hot(label, N, dtype=jnp.float32)
    if ls_eps > 0:
        oh = (1.0 - ls_eps) * oh + ls_eps / N
    return (oh * phi + (1.0 - oh) * cos) * s


if __name__ == "__main__":
    B, in_features, out_features = 8, 64, 1024   # 2 N-tiles -> exercises global iota offset

    key = jax.random.PRNGKey(0)
    kx, kw, kl = jax.random.split(key, 3)

    x = jax.random.normal(kx, (B, in_features), dtype=jnp.float32)
    # xavier_uniform_ init for weight (out_features, in_features), deterministic
    limit = math.sqrt(6.0 / (in_features + out_features))
    weight = jax.random.uniform(kw, (out_features, in_features),
                                dtype=jnp.float32, minval=-limit, maxval=limit)
    label = jax.random.randint(kl, (B,), 0, out_features, dtype=jnp.int32)

    ref = _reference(x, weight, label)

    # Exact-math path (f32 MXU inputs) — tight check against the PyTorch-faithful ref.
    out_f32 = arc_margin_forward(x, weight, label, mxu_dtype=jnp.float32)
    jax.block_until_ready(out_f32)
    err = float(jnp.max(jnp.abs(out_f32 - ref)))
    assert err < 2e-3, f"f32-MXU path max abs err {err}"

    # Default path: bf16 MXU inputs (f32 accumulate) — looser tolerance since the
    # cosine carries bf16 input rounding (s=30 amplifies it).
    out_bf16 = arc_margin_forward(x, weight, label)
    jax.block_until_ready(out_bf16)
    err_bf = float(jnp.max(jnp.abs(out_bf16 - ref)))
    assert err_bf < 0.5, f"bf16-MXU path max abs err {err_bf}"

    # Label-smoothing branch (full-tile phi path).
    ref_ls = _reference(x, weight, label, ls_eps=0.1)
    out_ls = arc_margin_forward(x, weight, label, ls_eps=0.1, mxu_dtype=jnp.float32)
    jax.block_until_ready(out_ls)
    err_ls = float(jnp.max(jnp.abs(out_ls - ref_ls)))
    assert err_ls < 2e-3, f"ls_eps path max abs err {err_ls}"

    # Awkward (non-aligned) shapes -> exercises B/N zero-padding + output slice.
    Bo, Ko, No = 10, 48, 700
    k1, k2, k3 = jax.random.split(jax.random.PRNGKey(1), 3)
    xo = jax.random.normal(k1, (Bo, Ko), dtype=jnp.float32)
    wo = jax.random.normal(k2, (No, Ko), dtype=jnp.float32) * 0.05
    lo = jax.random.randint(k3, (Bo,), 0, No, dtype=jnp.int32)
    ref_o = _reference(xo, wo, lo)
    out_o = arc_margin_forward(xo, wo, lo, mxu_dtype=jnp.float32)
    jax.block_until_ready(out_o)
    err_o = float(jnp.max(jnp.abs(out_o - ref_o)))
    assert out_o.shape == (Bo, No) and err_o < 2e-3, f"padded path max abs err {err_o}"

    print("KERNEL_OK")
</pallas_src>

<mosaic_0001>
module attributes {stable_mosaic.version = 11 : i64} {
  func.func @kernel(%arg0: i32, %arg1: i32, %arg2: memref<8x64xf32, #tpu.memory_space<vmem>>, %arg3: memref<512x64xf32, #tpu.memory_space<vmem>>, %arg4: memref<8x1xf32, #tpu.memory_space<vmem>>, %arg5: memref<1x512xf32, #tpu.memory_space<vmem>>, %arg6: memref<8x1xi32, #tpu.memory_space<vmem>>, %arg7: memref<8x512xf32, #tpu.memory_space<vmem>>) attributes {dimension_semantics = [#tpu.dimension_semantics<parallel>, #tpu.dimension_semantics<parallel>], iteration_bounds = array<i64: 2, 1>, scalar_prefetch = 0 : i64, scratch_operands = 0 : i64, tpu.core_type = #tpu.core_type<tc>, window_params = [{transform_indices = @transform_0, window_bounds = array<i64: 8, 64>}, {transform_indices = @transform_1, window_bounds = array<i64: 512, 64>}, {transform_indices = @transform_2, window_bounds = array<i64: 8, 1>}, {transform_indices = @transform_3, window_bounds = array<i64: 1, 512>}, {transform_indices = @transform_4, window_bounds = array<i64: 8, 1>}, {transform_indices = @transform_5, window_bounds = array<i64: 8, 512>}]} {
    %c0 = arith.constant 0 : index
    %c0_0 = arith.constant 0 : index
    %0 = vector.load %arg2[%c0, %c0_0] : memref<8x64xf32, #tpu.memory_space<vmem>>, vector<8x64xf32>
    %c0_1 = arith.constant 0 : index
    %c0_2 = arith.constant 0 : index
    %1 = vector.load %arg3[%c0_1, %c0_2] : memref<512x64xf32, #tpu.memory_space<vmem>>, vector<512x64xf32>
    %cst = arith.constant dense<0.000000e+00> : vector<8x512xf32>
    %2 = tpu.matmul %0, %1, %cst {dimension_numbers = #tpu.dot_dimension_numbers<[1], [1], [0], [0], [0, 0, 1, 0], [], []>} : vector<8x64xf32>, vector<512x64xf32>, vector<8x512xf32> -> vector<8x512xf32>
    %c0_3 = arith.constant 0 : index
    %c0_4 = arith.constant 0 : index
    %3 = vector.load %arg4[%c0_3, %c0_4] : memref<8x1xf32, #tpu.memory_space<vmem>>, vector<8x1xf32>
    %4 = vector.broadcast %3 : vector<8x1xf32> to vector<8x512xf32>
    %5 = arith.mulf %2, %4 : vector<8x512xf32>
    %c0_5 = arith.constant 0 : index
    %c0_6 = arith.constant 0 : index
    %6 = vector.load %arg5[%c0_5, %c0_6] : memref<1x512xf32, #tpu.memory_space<vmem>>, vector<1x512xf32>
    %7 = vector.broadcast %6 : vector<1x512xf32> to vector<8x512xf32>
    %8 = arith.mulf %5, %7 : vector<8x512xf32>
    %9 = tpu.iota {dimensions = array<i32: 1>} : vector<8x512xi32>
    %c512_i32 = arith.constant 512 : i32
    %10 = arith.muli %arg0, %c512_i32 : i32
    %11 = vector.broadcast %10 : i32 to vector<8x512xi32>
    %12 = arith.addi %9, %11 : vector<8x512xi32>
    %c0_7 = arith.constant 0 : index
    %c0_8 = arith.constant 0 : index
    %13 = vector.load %arg6[%c0_7, %c0_8] : memref<8x1xi32, #tpu.memory_space<vmem>>, vector<8x1xi32>
    %14 = vector.broadcast %13 : vector<8x1xi32> to vector<8x512xi32>
    %15 = arith.cmpi eq, %12, %14 : vector<8x512xi32>
    %cst_9 = arith.constant 0.000000e+00 : f32
    %16 = vector.broadcast %cst_9 : f32 to vector<8x512xf32>
    %17 = arith.select %15, %8, %16 : vector<8x512xi1>, vector<8x512xf32>
    %cst_10 = arith.constant dense<0.000000e+00> : vector<8xf32>
    %18 = vector.multi_reduction <add>, %17, %cst_10 [1] : vector<8x512xf32> to vector<8xf32>
    %19 = vector.shape_cast %18 : vector<8xf32> to vector<8x1xf32>
    %20 = arith.mulf %19, %19 : vector<8x1xf32>
    %cst_11 = arith.constant 1.000000e+00 : f32
    %21 = vector.broadcast %cst_11 : f32 to vector<8x1xf32>
    %22 = arith.subf %21, %20 : vector<8x1xf32>
    %cst_12 = arith.constant 0.000000e+00 : f32
    %23 = vector.broadcast %cst_12 : f32 to vector<8x1xf32>
    %24 = arith.maximumf %22, %23 : vector<8x1xf32>
    %25 = math.sqrt %24 : vector<8x1xf32>
    %cst_13 = arith.constant 0.87758255 : f32
    %26 = vector.broadcast %cst_13 : f32 to vector<8x1xf32>
    %27 = arith.mulf %19, %26 : vector<8x1xf32>
    %cst_14 = arith.constant 0.47942555 : f32
    %28 = vector.broadcast %cst_14 : f32 to vector<8x1xf32>
    %29 = arith.mulf %25, %28 : vector<8x1xf32>
    %30 = arith.subf %27, %29 : vector<8x1xf32>
    %cst_15 = arith.constant -0.87758255 : f32
    %31 = vector.broadcast %cst_15 : f32 to vector<8x1xf32>
    %32 = arith.cmpf ogt, %19, %31 : vector<8x1xf32>
    %cst_16 = arith.constant 0.239712775 : f32
    %33 = vector.broadcast %cst_16 : f32 to vector<8x1xf32>
    %34 = arith.subf %19, %33 : vector<8x1xf32>
    %35 = arith.select %32, %30, %34 : vector<8x1xi1>, vector<8x1xf32>
    %36 = arith.subf %35, %19 : vector<8x1xf32>
    %cst_17 = arith.constant 0.000000e+00 : f32
    %37 = vector.shape_cast %36 : vector<8x1xf32> to vector<8x1xf32>
    %38 = vector.broadcast %37 : vector<8x1xf32> to vector<8x512xf32>
    %39 = vector.broadcast %cst_17 : f32 to vector<8x512xf32>
    %40 = arith.select %15, %38, %39 : vector<8x512xi1>, vector<8x512xf32>
    %41 = arith.addf %8, %40 : vector<8x512xf32>
    %cst_18 = arith.constant 3.000000e+01 : f32
    %42 = vector.broadcast %cst_18 : f32 to vector<8x512xf32>
    %43 = arith.mulf %42, %41 : vector<8x512xf32>
    %c0_19 = arith.constant 0 : index
    %c0_20 = arith.constant 0 : index
    %44 = vector.load %arg7[%c0_19, %c0_20] : memref<8x512xf32, #tpu.memory_space<vmem>>, vector<8x512xf32>
    tpu.vector_store %arg7[%c0_19, %c0_20], %43 {strides = array<i32>} : memref<8x512xf32, #tpu.memory_space<vmem>>, vector<8x512xf32>,
    return
  }
  func.func @transform_0(%arg0: i32, %arg1: i32) -> (i32, i32) {
    %c0_i32 = arith.constant 0 : i32
    %c0_i32_0 = arith.constant 0 : i32
    return %arg1, %c0_i32 : i32, i32
  }
  func.func @transform_1(%arg0: i32, %arg1: i32) -> (i32, i32) {
    %c0_i32 = arith.constant 0 : i32
    %c0_i32_0 = arith.constant 0 : i32
    return %arg0, %c0_i32 : i32, i32
  }
  func.func @transform_2(%arg0: i32, %arg1: i32) -> (i32, i32) {
    %c0_i32 = arith.constant 0 : i32
    %c0_i32_0 = arith.constant 0 : i32
    return %arg1, %c0_i32 : i32, i32
  }
  func.func @transform_3(%arg0: i32, %arg1: i32) -> (i32, i32) {
    %c0_i32 = arith.constant 0 : i32
    %c0_i32_0 = arith.constant 0 : i32
    return %c0_i32, %arg0 : i32, i32
  }
  func.func @transform_4(%arg0: i32, %arg1: i32) -> (i32, i32) {
    %c0_i32 = arith.constant 0 : i32
    %c0_i32_0 = arith.constant 0 : i32
    return %arg1, %c0_i32 : i32, i32
  }
  func.func @transform_5(%arg0: i32, %arg1: i32) -> (i32, i32) {
    %c0_i32 = arith.constant 0 : i32
    return %arg1, %arg0 : i32, i32
  }
}

</mosaic_0001>

<llo_original>
// kernel: tpu_custom_call.1
$region0: #{tpu_custom_call.1}
  #allocation0 [shape = 'u32[]', space=smem, size = 0x4, offset = 0x4, fixed_abs, tag = 'smem constant byte address 0x4 - core index']
  #allocation1 [shape = 'u32[144,128]{1,0:T(1,128)}', space=vmem, size = 0x12000, scoped, tag = 'internal scratch']
  %s0 = inlined_call_operand.vmem [shape: f32[8,64], index: 0, kind: input, shape index: {}]
  %s1 = inlined_call_operand.vmem [shape: f32[1024,64], index: 1, kind: input, shape index: {}]
  %s2 = inlined_call_operand.vmem [shape: f32[8,1], index: 2, kind: input, shape index: {}]
  %s3 = inlined_call_operand.vmem [shape: f32[1,1024], index: 3, kind: input, shape index: {}]
  %s4 = inlined_call_operand.vmem [shape: s32[8,1], index: 4, kind: input, shape index: {}]
  %s5 = inlined_call_operand.hbm [shape: f32[8,1024], index: 5, kind: output, shape index: {}]
  %s6 = sld [smem:[#allocation0]]
  $region53: #{tpu_custom_call.1} parent=0
    _
  %s8 = ssub.s32 1, %s6
  %s9 = scalar_select 0, %s8, %s6
  $region1: #{tpu_custom_call.1} parent=0
    #allocation2 [shape = 'u8[32768]{0}', space=vmem, size = 0x8000, scoped, tag = 'output window, operand 0']
    #allocation3 [shape = 's32[2]{0}', space=sflag, size = 0x8, scoped, tag = 'scoped memory for tpu_custom_call.1']
    %10 = vsyncpa [#allocation3], 0
    %s11 = scalar_lea.sflag [#allocation3], 1
    %12 = vsyncpa %s11, 0
    loop: start=0, step=1, limit=4
    $region2: #{tpu_custom_call.1} parent=1 // loop_pre_header
      _
    $region3: #{tpu_custom_call.1} parent=1 // loop_header
      %s14 = sphi 0, %s18
      %p15 = scmp.ge.s32.totalorder %s14, 4
      %s21 = sphi 0, %s33
      %s22 = sphi 0, %s29
      %s23 = sphi 0, %s21
      %s24 = sphi 0, %s22
      %s25 = sphi 0, %s23
      %s26 = sphi 0, %s24
      %s36 = sphi 0, %s38
      %s39 = sphi 0, %s36
      %s40 = sphi 0, %s39
      %s56 = sphi 0, %s40
      %s62 = sphi 0, %s64
      %s65 = sphi 0, %s62
      %s66 = sphi 0, %s65
      %s82 = sphi 0, %s66
      %s88 = sphi 0, %s90
      %s91 = sphi 0, %s88
      %s92 = sphi 0, %s91
      %s108 = sphi 0, %s92
      %s114 = sphi 0, %s116
      %s117 = sphi 0, %s114
      %s118 = sphi 0, %s117
      %s134 = sphi 0, %s118
      %s140 = sphi 0, %s142
      %s143 = sphi 0, %s140
      %s144 = sphi 0, %s143
      %s160 = sphi 0, %s144
      %s168 = sphi 0, %s170
      %s171 = sphi 0, %s168
      %s172 = sphi 0, %s171
      %s188 = sphi 0, %s172
    $region4: #{tpu_custom_call.1} parent=1 // loop_header_branch
      %17 = sbr.rel (%p15) target = $region8
    $region5: #{tpu_custom_call.1} parent=1 // loop_body
      %s19 = ssub.s32 %s14, 1
      %s20 = ssub.s32 %s14, 2
      %s27 = sadd.s32 1, %s22
      %p28 = scmp.ge.s32.totalorder %s27, 1
      %s29 = scalar_select %p28, 0, %s27
      %s30 = sadd.s32 1, %s21
      %s31 = scalar_select %p28, %s30, %s21
      %p32 = scmp.ge.s32.totalorder %s31, 2
      %s33 = scalar_select %p32, 0, %s31
      %s34 = ssub.s32 %s22, %s29
      %p35 = scmp.eq.s32.totalorder %s34, 0
      %s37 = sadd.s32 %s36, 1
      %s38 = scalar_select %p35, %s36, %s37
      %p41 = pneg %p35
      %p42 = scmp.eq.s32.totalorder %s14, 1
      %p43 = por %p41, %p42
      %p44 = scmp.ne.s32.totalorder %s36, %s39
      %p45 = scmp.eq.s32.totalorder %s14, 0
      %p46 = por %p44, %p45
      %p47 = scmp.ne.s32.totalorder %s36, %s39
      %p48 = scmp.eq.s32.totalorder %s19, 1
      %p49 = por %p47, %p48
      %p50 = scmp.ne.s32.totalorder %s39, %s40
      %p51 = scmp.eq.s32.totalorder %s19, 0
      %p52 = por %p50, %p51
      %p53 = scmp.ne.s32.totalorder %s39, %s40
      %p54 = scmp.eq.s32.totalorder %s20, 1
      %p55 = por %p53, %p54
      %p57 = scmp.ne.s32.totalorder %s40, %s56
      %p58 = scmp.eq.s32.totalorder %s20, 0
      %p59 = por %p57, %p58
      %s60 = ssub.s32 %s21, %s33
      %p61 = scmp.eq.s32.totalorder %s60, 0
      %s63 = sadd.s32 %s62, 1
      %s64 = scalar_select %p61, %s62, %s63
      %p67 = pneg %p61
      %p68 = scmp.eq.s32.totalorder %s14, 1
      %p69 = por %p67, %p68
      %p70 = scmp.ne.s32.totalorder %s62, %s65
      %p71 = scmp.eq.s32.totalorder %s14, 0
      %p72 = por %p70, %p71
      %p73 = scmp.ne.s32.totalorder %s62, %s65
      %p74 = scmp.eq.s32.totalorder %s19, 1
      %p75 = por %p73, %p74
      %p76 = scmp.ne.s32.totalorder %s65, %s66
      %p77 = scmp.eq.s32.totalorder %s19, 0
      %p78 = por %p76, %p77
      %p79 = scmp.ne.s32.totalorder %s65, %s66
      %p80 = scmp.eq.s32.totalorder %s20, 1
      %p81 = por %p79, %p80
      %p83 = scmp.ne.s32.totalorder %s66, %s82
      %p84 = scmp.eq.s32.totalorder %s20, 0
      %p85 = por %p83, %p84
      %s86 = ssub.s32 %s22, %s29
      %p87 = scmp.eq.s32.totalorder %s86, 0
      %s89 = sadd.s32 %s88, 1
      %s90 = scalar_select %p87, %s88, %s89
      %p93 = pneg %p87
      %p94 = scmp.eq.s32.totalorder %s14, 1
      %p95 = por %p93, %p94
      %p96 = scmp.ne.s32.totalorder %s88, %s91
      %p97 = scmp.eq.s32.totalorder %s14, 0
      %p98 = por %p96, %p97
      %p99 = scmp.ne.s32.totalorder %s88, %s91
      %p100 = scmp.eq.s32.totalorder %s19, 1
      %p101 = por %p99, %p100
      %p102 = scmp.ne.s32.totalorder %s91, %s92
      %p103 = scmp.eq.s32.totalorder %s19, 0
      %p104 = por %p102, %p103
      %p105 = scmp.ne.s32.totalorder %s91, %s92
      %p106 = scmp.eq.s32.totalorder %s20, 1
      %p107 = por %p105, %p106
      %p109 = scmp.ne.s32.totalorder %s92, %s108
      %p110 = scmp.eq.s32.totalorder %s20, 0
      %p111 = por %p109, %p110
      %s112 = ssub.s32 %s21, %s33
      %p113 = scmp.eq.s32.totalorder %s112, 0
      %s115 = sadd.s32 %s114, 1
      %s116 = scalar_select %p113, %s114, %s115
      %p119 = pneg %p113
      %p120 = scmp.eq.s32.totalorder %s14, 1
      %p121 = por %p119, %p120
      %p122 = scmp.ne.s32.totalorder %s114, %s117
      %p123 = scmp.eq.s32.totalorder %s14, 0
      %p124 = por %p122, %p123
      %p125 = scmp.ne.s32.totalorder %s114, %s117
      %p126 = scmp.eq.s32.totalorder %s19, 1
      %p127 = por %p125, %p126
      %p128 = scmp.ne.s32.totalorder %s117, %s118
      %p129 = scmp.eq.s32.totalorder %s19, 0
      %p130 = por %p128, %p129
      %p131 = scmp.ne.s32.totalorder %s117, %s118
      %p132 = scmp.eq.s32.totalorder %s20, 1
      %p133 = por %p131, %p132
      %p135 = scmp.ne.s32.totalorder %s118, %s134
      %p136 = scmp.eq.s32.totalorder %s20, 0
      %p137 = por %p135, %p136
      %s138 = ssub.s32 %s22, %s29
      %p139 = scmp.eq.s32.totalorder %s138, 0
      %s141 = sadd.s32 %s140, 1
      %s142 = scalar_select %p139, %s140, %s141
      %p145 = pneg %p139
      %p146 = scmp.eq.s32.totalorder %s14, 1
      %p147 = por %p145, %p146
      %p148 = scmp.ne.s32.totalorder %s140, %s143
      %p149 = scmp.eq.s32.totalorder %s14, 0
      %p150 = por %p148, %p149
      %p151 = scmp.ne.s32.totalorder %s140, %s143
      %p152 = scmp.eq.s32.totalorder %s19, 1
      %p153 = por %p151, %p152
      %p154 = scmp.ne.s32.totalorder %s143, %s144
      %p155 = scmp.eq.s32.totalorder %s19, 0
      %p156 = por %p154, %p155
      %p157 = scmp.ne.s32.totalorder %s143, %s144
      %p158 = scmp.eq.s32.totalorder %s20, 1
      %p159 = por %p157, %p158
      %p161 = scmp.ne.s32.totalorder %s144, %s160
      %p162 = scmp.eq.s32.totalorder %s20, 0
      %p163 = por %p161, %p162
      %s164 = ssub.s32 %s22, %s29
      %s165 = ssub.s32 %s21, %s33
      %s166 = sor.u32 %s164, %s165
      %p167 = scmp.eq.s32.totalorder %s166, 0
      %s169 = sadd.s32 %s168, 1
      %s170 = scalar_select %p167, %s168, %s169
      %p173 = pneg %p167
      %p174 = scmp.eq.s32.totalorder %s14, 1
      %p175 = por %p173, %p174
      %p176 = scmp.ne.s32.totalorder %s168, %s171
      %p177 = scmp.eq.s32.totalorder %s14, 0
      %p178 = por %p176, %p177
      %p179 = scmp.ne.s32.totalorder %s168, %s171
      %p180 = scmp.eq.s32.totalorder %s19, 1
      %p181 = por %p179, %p180
      %p182 = scmp.ne.s32.totalorder %s171, %s172
      %p183 = scmp.eq.s32.totalorder %s19, 0
      %p184 = por %p182, %p183
      %p185 = scmp.ne.s32.totalorder %s171, %s172
      %p186 = scmp.eq.s32.totalorder %s20, 1
      %p187 = por %p185, %p186
      %p189 = scmp.ne.s32.totalorder %s172, %s188
      %p190 = scmp.eq.s32.totalorder %s20, 0
      %p191 = por %p189, %p190
      %p192 = scmp.le.s32.totalorder 1, %s14
      %p193 = scmp.lt.s32.totalorder %s14, 3
      %p194 = pnand %p192, %p193
      %p195 = pneg %p194
      // Predicated region
      $region9: #{tpu_custom_call.1} parent=5 // pred_check
        _
      $region10: #{tpu_custom_call.1} parent=5 // pred_check_branch
        %197 = sbr.rel (%p194) target = $region12
      $region11: #{tpu_custom_call.1} parent=5 // pred_region
        %s198 = ssub.s32 %s14, 1
        // Predicated region
        $region13: #{tpu_custom_call.1} parent=11 // pred_check
          %p199 = pneg %p52
        $region14: #{tpu_custom_call.1} parent=11 // pred_check_branch
          %201 = sbr.rel (%p199) target = $region16
        $region15: #{tpu_custom_call.1} parent=11 // pred_region
          %p202 = scmp.lt.s32.totalorder %s24, 0
          %s203 = scalar_select %p202, %s24, 0
          %s204 = smul.addr %s203, 8
          %s205 = scalar_lea.vmem %s0, %s204
        $region16: #{tpu_custom_call.1} parent=11 // pred_fallthru
          _
        // Predicated region
        $region17: #{tpu_custom_call.1} parent=11 // pred_check
          %p206 = pneg %p104
        $region18: #{tpu_custom_call.1} parent=11 // pred_check_branch
          %208 = sbr.rel (%p206) target = $region20
        $region19: #{tpu_custom_call.1} parent=11 // pred_region
          %p209 = scmp.lt.s32.totalorder %s24, 0
          %s210 = scalar_select %p209, %s24, 0
          %s211 = smul.addr %s210, 8
          %s212 = scalar_lea.vmem %s2, %s211
        $region20: #{tpu_custom_call.1} parent=11 // pred_fallthru
          _
        // Predicated region
        $region21: #{tpu_custom_call.1} parent=11 // pred_check
          %p213 = pneg %p156
        $region22: #{tpu_custom_call.1} parent=11 // pred_check_branch
          %215 = sbr.rel (%p213) target = $region24
        $region23: #{tpu_custom_call.1} parent=11 // pred_region
          %p216 = scmp.lt.s32.totalorder %s24, 0
          %s217 = scalar_select %p216, %s24, 0
          %s218 = smul.addr %s217, 8
          %s219 = scalar_lea.vmem %s4, %s218
        $region24: #{tpu_custom_call.1} parent=11 // pred_fallthru
          _
      $region12: #{tpu_custom_call.1} parent=5 // pred_fallthru
        _
      %p220 = scmp.lt.s32.totalorder %s14, 2
      // Predicated region
      $region25: #{tpu_custom_call.1} parent=5 // pred_check
        %p221 = pneg %p220
      $region26: #{tpu_custom_call.1} parent=5 // pred_check_branch
        %223 = sbr.rel (%p221) target = $region28
      $region27: #{tpu_custom_call.1} parent=5 // pred_region
        // Predicated region
        $region29: #{tpu_custom_call.1} parent=27 // pred_check
          %p224 = pneg %p72
        $region30: #{tpu_custom_call.1} parent=27 // pred_check_branch
          %226 = sbr.rel (%p224) target = $region32
        $region31: #{tpu_custom_call.1} parent=27 // pred_region
          %s227 = smul.u32 64, %s21
          %p228 = scmp.lt.s32.totalorder %s227, 127
          %s229 = scalar_select %p228, %s227, 127
          %s230 = smul.addr %s229, 8
          %s231 = scalar_lea.vmem %s1, %s230
          %s232 = smul.u32 64, %s21
        $region32: #{tpu_custom_call.1} parent=27 // pred_fallthru
          _
        // Predicated region
        $region33: #{tpu_custom_call.1} parent=27 // pred_check
          %p233 = pneg %p124
        $region34: #{tpu_custom_call.1} parent=27 // pred_check_branch
          %235 = sbr.rel (%p233) target = $region36
        $region35: #{tpu_custom_call.1} parent=27 // pred_region
          %s236 = smul.u32 4, %s21
          %p237 = scmp.lt.s32.totalorder %s236, 7
          %s238 = scalar_select %p237, %s236, 7
          %s239 = scalar_lea.vmem %s3, %s238
          %s240 = smul.u32 4, %s21
        $region36: #{tpu_custom_call.1} parent=27 // pred_fallthru
          _
      $region28: #{tpu_custom_call.1} parent=5 // pred_fallthru
        _
      %p241 = scmp.le.s32.totalorder 1, %s14
      %p242 = scmp.lt.s32.totalorder %s14, 3
      %p243 = pnand %p241, %p242
      %p244 = pneg %p243
      // Predicated region
      $region37: #{tpu_custom_call.1} parent=5 // pred_check
        _
      $region38: #{tpu_custom_call.1} parent=5 // pred_check_branch
        %246 = sbr.rel (%p243) target = $region40
      $region39: #{tpu_custom_call.1} parent=5 // pred_region
        %s247 = ssub.s32 %s14, 1
        %p248 = scmp.lt.s32.totalorder %s24, 0
        %s249 = scalar_select %p248, %s24, 0
        %s250 = smul.addr %s249, 8
        %s251 = scalar_lea.vmem %s0, %s250
        %p252 = pneg %p52
        %p253 = pneg %p49
        %s254 = smul.u32 64, %s23
        %p255 = scmp.lt.s32.totalorder %s254, 127
        %s256 = scalar_select %p255, %s254, 127
        %s257 = smul.addr %s256, 8
        %s258 = scalar_lea.vmem %s1, %s257
        %p259 = pneg %p78
        %p260 = pneg %p75
        %p261 = scmp.lt.s32.totalorder %s24, 0
        %s262 = scalar_select %p261, %s24, 0
        %s263 = smul.addr %s262, 8
        %s264 = scalar_lea.vmem %s2, %s263
        %p265 = pneg %p104
        %p266 = pneg %p101
        %s267 = smul.u32 4, %s23
        %p268 = scmp.lt.s32.totalorder %s267, 7
        %s269 = scalar_select %p268, %s267, 7
        %s270 = scalar_lea.vmem %s3, %s269
        %p271 = pneg %p130
        %p272 = pneg %p127
        %p273 = scmp.lt.s32.totalorder %s24, 0
        %s274 = scalar_select %p273, %s24, 0
        %s275 = smul.addr %s274, 8
        %s276 = scalar_lea.vmem %s4, %s275
        %p277 = pneg %p156
        %p278 = pneg %p153
        %p279 = pneg %p184
        %p280 = pneg %p181
        %s281 = sand.u32 %s171, 1
        %s282 = scalar_lea.sflag [#allocation3], %s281
        %s283 = sand.u32 %s171, 1
        %s284 = smul.addr %s283, 32
        %s285 = scalar_lea.vmem [#allocation2], %s284
        %p286 = scmp.lt.s32.totalorder %s24, 0
        %s287 = scalar_select %p286, %s24, 0
        %s288 = smul.addr %s287, 8
        %s289 = scalar_lea.vmem %s0, %s288
        %s290 = smul.u32 64, %s23
        %p291 = scmp.lt.s32.totalorder %s290, 127
        %s292 = scalar_select %p291, %s290, 127
        %s293 = smul.addr %s292, 8
        %s294 = scalar_lea.vmem %s1, %s293
        %s295 = smul.u32 64, %s23
        %p296 = scmp.lt.s32.totalorder %s24, 0
        %s297 = scalar_select %p296, %s24, 0
        %s298 = smul.addr %s297, 8
        %s299 = scalar_lea.vmem %s2, %s298
        %s300 = smul.u32 4, %s23
        %p301 = scmp.lt.s32.totalorder %s300, 7
        %s302 = scalar_select %p301, %s300, 7
        %s303 = scalar_lea.vmem %s3, %s302
        %s304 = smul.u32 4, %s23
        %p305 = scmp.lt.s32.totalorder %s24, 0
        %s306 = scalar_select %p305, %s24, 0
        %s307 = smul.addr %s306, 8
        %s308 = scalar_lea.vmem %s4, %s307
        %s309 = smul.u32 4, %s23
        %v310 = vld [vmem:[%s289] sm:$0xff]
        %v311 = vld [vmem:[%s294] sm:$0xff]
        %v312 = vld [vmem:[%s294 + $0x8] sm:$0xff]
        %v313 = vld [vmem:[%s294 + $0x10] sm:$0xff]
        %v314 = vld [vmem:[%s294 + $0x18] sm:$0xff]
        %v315 = vld [vmem:[%s294 + $0x20] sm:$0xff]
        %v316 = vld [vmem:[%s294 + $0x28] sm:$0xff]
        %v317 = vld [vmem:[%s294 + $0x30] sm:$0xff]
        %v318 = vld [vmem:[%s294 + $0x38] sm:$0xff]
        %v319 = vld [vmem:[%s294 + $0x40] sm:$0xff]
        %v320 = vld [vmem:[%s294 + $0x48] sm:$0xff]
        %v321 = vld [vmem:[%s294 + $0x50] sm:$0xff]
        %v322 = vld [vmem:[%s294 + $0x58] sm:$0xff]
        %v323 = vld [vmem:[%s294 + $0x60] sm:$0xff]
        %v324 = vld [vmem:[%s294 + $0x68] sm:$0xff]
        %v325 = vld [vmem:[%s294 + $0x70] sm:$0xff]
        %v326 = vld [vmem:[%s294 + $0x78] sm:$0xff]
        %v327 = vld [vmem:[%s294 + $0x80] sm:$0xff]
        %v328 = vld [vmem:[%s294 + $0x88] sm:$0xff]
        %v329 = vld [vmem:[%s294 + $0x90] sm:$0xff]
        %v330 = vld [vmem:[%s294 + $0x98] sm:$0xff]
        %v331 = vld [vmem:[%s294 + $0xa0] sm:$0xff]
        %v332 = vld [vmem:[%s294 + $0xa8] sm:$0xff]
        %v333 = vld [vmem:[%s294 + $0xb0] sm:$0xff]
        %v334 = vld [vmem:[%s294 + $0xb8] sm:$0xff]
        %v335 = vld [vmem:[%s294 + $0xc0] sm:$0xff]
        %v336 = vld [vmem:[%s294 + $0xc8] sm:$0xff]
        %v337 = vld [vmem:[%s294 + $0xd0] sm:$0xff]
        %v338 = vld [vmem:[%s294 + $0xd8] sm:$0xff]
        %v339 = vld [vmem:[%s294 + $0xe0] sm:$0xff]
        %v340 = vld [vmem:[%s294 + $0xe8] sm:$0xff]
        %v341 = vld [vmem:[%s294 + $0xf0] sm:$0xff]
        %v342 = vld [vmem:[%s294 + $0xf8] sm:$0xff]
        %v343 = vld [vmem:[%s294 + $0x100] sm:$0xff]
        %v344 = vld [vmem:[%s294 + $0x108] sm:$0xff]
        %v345 = vld [vmem:[%s294 + $0x110] sm:$0xff]
        %v346 = vld [vmem:[%s294 + $0x118] sm:$0xff]
        %v347 = vld [vmem:[%s294 + $0x120] sm:$0xff]
        %v348 = vld [vmem:[%s294 + $0x128] sm:$0xff]
        %v349 = vld [vmem:[%s294 + $0x130] sm:$0xff]
        %v350 = vld [vmem:[%s294 + $0x138] sm:$0xff]
        %v351 = vld [vmem:[%s294 + $0x140] sm:$0xff]
        %v352 = vld [vmem:[%s294 + $0x148] sm:$0xff]
        %v353 = vld [vmem:[%s294 + $0x150] sm:$0xff]
        %v354 = vld [vmem:[%s294 + $0x158] sm:$0xff]
        %v355 = vld [vmem:[%s294 + $0x160] sm:$0xff]
        %v356 = vld [vmem:[%s294 + $0x168] sm:$0xff]
        %v357 = vld [vmem:[%s294 + $0x170] sm:$0xff]
        %v358 = vld [vmem:[%s294 + $0x178] sm:$0xff]
        %v359 = vld [vmem:[%s294 + $0x180] sm:$0xff]
        %v360 = vld [vmem:[%s294 + $0x188] sm:$0xff]
        %v361 = vld [vmem:[%s294 + $0x190] sm:$0xff]
        %v362 = vld [vmem:[%s294 + $0x198] sm:$0xff]
        %v363 = vld [vmem:[%s294 + $0x1a0] sm:$0xff]
        %v364 = vld [vmem:[%s294 + $0x1a8] sm:$0xff]
        %v365 = vld [vmem:[%s294 + $0x1b0] sm:$0xff]
        %v366 = vld [vmem:[%s294 + $0x1b8] sm:$0xff]
        %v367 = vld [vmem:[%s294 + $0x1c0] sm:$0xff]
        %v368 = vld [vmem:[%s294 + $0x1c8] sm:$0xff]
        %v369 = vld [vmem:[%s294 + $0x1d0] sm:$0xff]
        %v370 = vld [vmem:[%s294 + $0x1d8] sm:$0xff]
        %v371 = vld [vmem:[%s294 + $0x1e0] sm:$0xff]
        %v372 = vld [vmem:[%s294 + $0x1e8] sm:$0xff]
        %v373 = vld [vmem:[%s294 + $0x1f0] sm:$0xff]
        %v374 = vld [vmem:[%s294 + $0x1f8] sm:$0xff]
        %vm375 = vcmask 523264
        %v377 = vsel %vm375, %v310, 0
        %v380 = vsel %vm375, %v311, 0
        %v383 = vsel %vm375, %v312, 0
        %v386 = vsel %vm375, %v313, 0
        %v389 = vsel %vm375, %v314, 0
        %v392 = vsel %vm375, %v315, 0
        %v395 = vsel %vm375, %v316, 0
        %v398 = vsel %vm375, %v317, 0
        %v401 = vsel %vm375, %v318, 0
        %v404 = vsel %vm375, %v319, 0
        %v407 = vsel %vm375, %v320, 0
        %v410 = vsel %vm375, %v321, 0
        %v413 = vsel %vm375, %v322, 0
        %v416 = vsel %vm375, %v323, 0
        %v419 = vsel %vm375, %v324, 0
        %v422 = vsel %vm375, %v325, 0
        %v425 = vsel %vm375, %v326, 0
        %v428 = vsel %vm375, %v327, 0
        %v431 = vsel %vm375, %v328, 0
        %v434 = vsel %vm375, %v329, 0
        %v437 = vsel %vm375, %v330, 0
        %v440 = vsel %vm375, %v331, 0
        %v443 = vsel %vm375, %v332, 0
        %v446 = vsel %vm375, %v333, 0
        %v449 = vsel %vm375, %v334, 0
        %v452 = vsel %vm375, %v335, 0
        %v455 = vsel %vm375, %v336, 0
        %v458 = vsel %vm375, %v337, 0
        %v461 = vsel %vm375, %v338, 0
        %v464 = vsel %vm375, %v339, 0
        %v467 = vsel %vm375, %v340, 0
        %v470 = vsel %vm375, %v341, 0
        %v473 = vsel %vm375, %v342, 0
        %v476 = vsel %vm375, %v343, 0
        %v479 = vsel %vm375, %v344, 0
        %v482 = vsel %vm375, %v345, 0
        %v485 = vsel %vm375, %v346, 0
        %v488 = vsel %vm375, %v347, 0
        %v491 = vsel %vm375, %v348, 0
        %v494 = vsel %vm375, %v349, 0
        %v497 = vsel %vm375, %v350, 0
        %v500 = vsel %vm375, %v351, 0
        %v503 = vsel %vm375, %v352, 0
        %v506 = vsel %vm375, %v353, 0
        %v509 = vsel %vm375, %v354, 0
        %v512 = vsel %vm375, %v355, 0
        %v515 = vsel %vm375, %v356, 0
        %v518 = vsel %vm375, %v357, 0
        %v521 = vsel %vm375, %v358, 0
        %v524 = vsel %vm375, %v359, 0
        %v527 = vsel %vm375, %v360, 0
        %v530 = vsel %vm375, %v361, 0
        %v533 = vsel %vm375, %v362, 0
        %v536 = vsel %vm375, %v363, 0
        %v539 = vsel %vm375, %v364, 0
        %v542 = vsel %vm375, %v365, 0
        %v545 = vsel %vm375, %v366, 0
        %v548 = vsel %vm375, %v367, 0
        %v551 = vsel %vm375, %v368, 0
        %v554 = vsel %vm375, %v369, 0
        %v557 = vsel %vm375, %v370, 0
        %v560 = vsel %vm375, %v371, 0
        %v563 = vsel %vm375, %v372, 0
        %v566 = vsel %vm375, %v373, 0
        %v569 = vsel %vm375, %v374, 0
        %571 = vmatprep.subr.mxu0 0.0
        %572 = vmatpush1.xpose.msra.mxu0 %v380
        %573 = vmatprep.subr.mxu0 0.0
        %574 = vmatpush1.xpose.msra.mxu0 %v383
        %575 = vmatprep.subr.mxu0 0.0
        %576 = vmatpush1.xpose.msra.mxu0 %v386
        %577 = vmatprep.subr.mxu0 0.0
        %578 = vmatpush1.xpose.msra.mxu0 %v389
        %579 = vmatprep.subr.mxu0 0.0
        %580 = vmatpush1.xpose.msra.mxu0 %v392
        %581 = vmatprep.subr.mxu0 0.0
        %582 = vmatpush1.xpose.msra.mxu0 %v395
        %583 = vmatprep.subr.mxu0 0.0
        %584 = vmatpush1.xpose.msra.mxu0 %v398
        %585 = vmatprep.subr.mxu0 0.0
        %586 = vmatpush1.xpose.msra.mxu0 %v401
        %587 = vmatprep.subr.mxu0 0.0
        %588 = vmatpush1.xpose.msra.mxu0 %v404
        %589 = vmatprep.subr.mxu0 0.0
        %590 = vmatpush1.xpose.msra.mxu0 %v407
        %591 = vmatprep.subr.mxu0 0.0
        %592 = vmatpush1.xpose.msra.mxu0 %v410
        %593 = vmatprep.subr.mxu0 0.0
        %594 = vmatpush1.xpose.msra.mxu0 %v413
        %595 = vmatprep.subr.mxu0 0.0
        %596 = vmatpush1.xpose.msra.mxu0 %v416
        %597 = vmatprep.subr.mxu0 0.0
        %598 = vmatpush1.xpose.msra.mxu0 %v419
        %599 = vmatprep.subr.mxu0 0.0
        %600 = vmatpush1.xpose.msra.mxu0 %v422
        %601 = vmatprep.subr.mxu0 0.0
        %602 = vmatpush1.xpose.msra.mxu0 %v425
        %603 = vmatprep.subr.mxu0 0.0
        %604 = vmatpush1.xpose.msra.mxu0 %v428
        %605 = vmatprep.subr.mxu0 0.0
        %606 = vmatpush1.xpose.msra.mxu0 %v431
        %607 = vmatprep.subr.mxu0 0.0
        %608 = vmatpush1.xpose.msra.mxu0 %v434
        %609 = vmatprep.subr.mxu0 0.0
        %610 = vmatpush1.xpose.msra.mxu0 %v437
        %611 = vmatprep.subr.mxu0 0.0
        %612 = vmatpush1.xpose.msra.mxu0 %v440
        %613 = vmatprep.subr.mxu0 0.0
        %614 = vmatpush1.xpose.msra.mxu0 %v443
        %615 = vmatprep.subr.mxu0 0.0
        %616 = vmatpush1.xpose.msra.mxu0 %v446
        %617 = vmatprep.subr.mxu0 0.0
        %618 = vmatpush1.xpose.msra.mxu0 %v449
        %619 = vmatprep.subr.mxu0 0.0
        %620 = vmatpush1.xpose.msra.mxu0 %v452
        %621 = vmatprep.subr.mxu0 0.0
        %622 = vmatpush1.xpose.msra.mxu0 %v455
        %623 = vmatprep.subr.mxu0 0.0
        %624 = vmatpush1.xpose.msra.mxu0 %v458
        %625 = vmatprep.subr.mxu0 0.0
        %626 = vmatpush1.xpose.msra.mxu0 %v461
        %627 = vmatprep.subr.mxu0 0.0
        %628 = vmatpush1.xpose.msra.mxu0 %v464
        %629 = vmatprep.subr.mxu0 0.0
        %630 = vmatpush1.xpose.msra.mxu0 %v467
        %631 = vmatprep.subr.mxu0 0.0
        %632 = vmatpush1.xpose.msra.mxu0 %v470
        %633 = vmatprep.subr.mxu0 0.0
        %634 = vmatpush1.xpose.msra.mxu0 %v473
        %635 = vmatprep.mubr.f32.mxu0 0.0
        %636 = vmatmul.mubr.f32.gmra.mrb[0].mxu0 %v377
        %v637 = vpop.f32.mrb[0].mxu0
        %v638 = vadd.f32 0.0, %v637
        %v639 = vpop.f32.mrb[0].mxu0
        %v640 = vadd.f32 0.0, %v639
        %641 = vdwg.mxu0
        %642 = vmatprep.subr.mxu0 0.0
        %643 = vmatpush1.xpose.msra.mxu0 %v476
        %644 = vmatprep.subr.mxu0 0.0
        %645 = vmatpush1.xpose.msra.mxu0 %v479
        %646 = vmatprep.subr.mxu0 0.0
        %647 = vmatpush1.xpose.msra.mxu0 %v482
        %648 = vmatprep.subr.mxu0 0.0
        %649 = vmatpush1.xpose.msra.mxu0 %v485
        %650 = vmatprep.subr.mxu0 0.0
        %651 = vmatpush1.xpose.msra.mxu0 %v488
        %652 = vmatprep.subr.mxu0 0.0
        %653 = vmatpush1.xpose.msra.mxu0 %v491
        %654 = vmatprep.subr.mxu0 0.0
        %655 = vmatpush1.xpose.msra.mxu0 %v494
        %656 = vmatprep.subr.mxu0 0.0
        %657 = vmatpush1.xpose.msra.mxu0 %v497
        %658 = vmatprep.subr.mxu0 0.0
        %659 = vmatpush1.xpose.msra.mxu0 %v500
        %660 = vmatprep.subr.mxu0 0.0
        %661 = vmatpush1.xpose.msra.mxu0 %v503
        %662 = vmatprep.subr.mxu0 0.0
        %663 = vmatpush1.xpose.msra.mxu0 %v506
        %664 = vmatprep.subr.mxu0 0.0
        %665 = vmatpush1.xpose.msra.mxu0 %v509
        %666 = vmatprep.subr.mxu0 0.0
        %667 = vmatpush1.xpose.msra.mxu0 %v512
        %668 = vmatprep.subr.mxu0 0.0
        %669 = vmatpush1.xpose.msra.mxu0 %v515
        %670 = vmatprep.subr.mxu0 0.0
        %671 = vmatpush1.xpose.msra.mxu0 %v518
        %672 = vmatprep.subr.mxu0 0.0
        %673 = vmatpush1.xpose.msra.mxu0 %v521
        %674 = vmatprep.subr.mxu0 0.0
        %675 = vmatpush1.xpose.msra.mxu0 %v524
        %676 = vmatprep.subr.mxu0 0.0
        %677 = vmatpush1.xpose.msra.mxu0 %v527
        %678 = vmatprep.subr.mxu0 0.0
        %679 = vmatpush1.xpose.msra.mxu0 %v530
        %680 = vmatprep.subr.mxu0 0.0
        %681 = vmatpush1.xpose.msra.mxu0 %v533
        %682 = vmatprep.subr.mxu0 0.0
        %683 = vmatpush1.xpose.msra.mxu0 %v536
        %684 = vmatprep.subr.mxu0 0.0
        %685 = vmatpush1.xpose.msra.mxu0 %v539
        %686 = vmatprep.subr.mxu0 0.0
        %687 = vmatpush1.xpose.msra.mxu0 %v542
        %688 = vmatprep.subr.mxu0 0.0
        %689 = vmatpush1.xpose.msra.mxu0 %v545
        %690 = vmatprep.subr.mxu0 0.0
        %691 = vmatpush1.xpose.msra.mxu0 %v548
        %692 = vmatprep.subr.mxu0 0.0
        %693 = vmatpush1.xpose.msra.mxu0 %v551
        %694 = vmatprep.subr.mxu0 0.0
        %695 = vmatpush1.xpose.msra.mxu0 %v554
        %696 = vmatprep.subr.mxu0 0.0
        %697 = vmatpush1.xpose.msra.mxu0 %v557
        %698 = vmatprep.subr.mxu0 0.0
        %699 = vmatpush1.xpose.msra.mxu0 %v560
        %700 = vmatprep.subr.mxu0 0.0
        %701 = vmatpush1.xpose.msra.mxu0 %v563
        %702 = vmatprep.subr.mxu0 0.0
        %703 = vmatpush1.xpose.msra.mxu0 %v566
        %704 = vmatprep.subr.mxu0 0.0
        %705 = vmatpush1.xpose.msra.mxu0 %v569
        %706 = vmatprep.mubr.f32.mxu0 0.0
        %707 = vmatmul.mubr.f32.gmra.mrb[0].mxu0 %v377
        %v708 = vpop.f32.mrb[0].mxu0
        %v709 = vadd.f32 0.0, %v708
        %v710 = vpop.f32.mrb[0].mxu0
        %v711 = vadd.f32 0.0, %v710
        %712 = vdwg.mxu0
        %v713 = vld [vmem:[%s299] sm:$0xff]
        %715 = vset.pattern.permute.xlu0 0
        %716 = vperm.xlu0 %715, %v713
        %v717 = vpop.permute.xlu0 %716
        %v719 = vmul.f32 %v638, %v717
        %v720 = vmul.f32 %v640, %v717
        %v721 = vmul.f32 %v709, %v717
        %v722 = vmul.f32 %v711, %v717
        %v723 = vld [vmem:[%s303] sm:$0xf]
        %v725 = vlaneseq
        %v726 = vshrl.u32 %v725, 7
        %v727 = vsub.s32 0, %v726
        %v728 = vrot.slane %v723, %v727
        %v729 = vlaneseq
        %v730 = vshrl.u32 %v729, 7
        %v731 = vsub.s32 1, %v730
        %v732 = vrot.slane %v723, %v731
        %v733 = vlaneseq
        %v734 = vshrl.u32 %v733, 7
        %v735 = vsub.s32 2, %v734
        %v736 = vrot.slane %v723, %v735
        %v737 = vlaneseq
        %v738 = vshrl.u32 %v737, 7
        %v739 = vsub.s32 3, %v738
        %v740 = vrot.slane %v723, %v739
        %v745 = vmul.f32 %v719, %v728
        %v746 = vmul.f32 %v720, %v732
        %v747 = vmul.f32 %v721, %v736
        %v748 = vmul.f32 %v722, %v740
        %v749 = vlaneseq
        %v750 = vand.u32 %v749, 127
        %v751 = vadd.s32 %v750, 128
        %v752 = vadd.s32 %v750, 256
        %v753 = vadd.s32 %v750, 384
        %s754 = smul.u32 %s23, 512
        %v755 = vstv %s754
        %v756 = vadd.s32 %v750, %v755
        %v757 = vadd.s32 %v751, %v755
        %v758 = vadd.s32 %v752, %v755
        %v759 = vadd.s32 %v753, %v755
        %v760 = vld [vmem:[%s308] sm:$0xff]
        %761 = vset.pattern.permute.xlu0 0
        %762 = vperm.xlu0 %761, %v760
        %v763 = vpop.permute.xlu0 %762
        %vm764 = vcmp.eq.s32.totalorder %v756, %v763
        %vm765 = vcmp.eq.s32.totalorder %v757, %v763
        %vm766 = vcmp.eq.s32.totalorder %v758, %v763
        %vm767 = vcmp.eq.s32.totalorder %v759, %v763
        %v768 = vsel %vm764, %v745, 0.0
        %v769 = vsel %vm765, %v746, 0.0
        %v770 = vsel %vm766, %v747, 0.0
        %v771 = vsel %vm767, %v748, 0.0
        %v772 = vadd.f32 %v768, %v769
        %v773 = vadd.f32 %v772, %v770
        %v774 = vadd.f32 %v773, %v771
        %775 = vadd.xlane.f32.xlu0 %v774
        %v776 = vpop.xlane.xlu0 %775
        %v777 = vmul.f32 %v776, %v776
        %v778 = vsub.f32 1.0, %v777
        %v779 = vmax.f32 %v778, 0.0
        %v780 = vrsqrt.pop %v779
        %v781 = vmul.f32 %v779, %v780
        %vm782 = vcmp.eq.f32.partialorder %v779, inf
        %v783 = vsel %vm782, %v779, %v781
        %vm784 = vcmp.eq.f32.partialorder %v779, 0.0
        %v785 = vand.u32 %v779, 2147483648
        %v786 = vsel %vm784, %v785, %v783
        %v787 = vmul.f32 %v776, 0.87758255
        %v788 = vmul.f32 %v786, 0.47942555
        %v789 = vsub.f32 %v787, %v788
        %vm790 = vcmp.gt.f32.partialorder %v776, -0.87758255
        %v791 = vsub.f32 %v776, 0.23971277
        %v792 = vsel %vm790, %v789, %v791
        %v793 = vsub.f32 %v792, %v776
        %v794 = vsel %vm764, %v793, 0.0
        %v795 = vsel %vm765, %v793, 0.0
        %v796 = vsel %vm766, %v793, 0.0
        %v797 = vsel %vm767, %v793, 0.0
        %v798 = vadd.f32 %v745, %v794
        %v799 = vadd.f32 %v746, %v795
        %v800 = vadd.f32 %v747, %v796
        %v801 = vadd.f32 %v748, %v797
        %v802 = vmul.f32 %v798, 30.0
        %v803 = vmul.f32 %v799, 30.0
        %v804 = vmul.f32 %v800, 30.0
        %v805 = vmul.f32 %v801, 30.0
        %806 = vst [vmem:[%s285] sm:$0xff] %v802
        %807 = vst [vmem:[%s285 + $0x8] sm:$0xff] %v803
        %808 = vst [vmem:[%s285 + $0x10] sm:$0xff] %v804
        %809 = vst [vmem:[%s285 + $0x18] sm:$0xff] %v805
        %s810 = sand.u32 %s171, 1
        %s811 = scalar_lea.sflag [#allocation3], %s810
        %s812 = sand.u32 %s171, 1
        %s813 = smul.addr %s812, 32
        %s814 = scalar_lea.vmem [#allocation2], %s813
        // Predicated region
        $region41: #{tpu_custom_call.1} parent=39 // pred_check
          %p815 = pneg %p181
        $region42: #{tpu_custom_call.1} parent=39 // pred_check_branch
          %817 = sbr.rel (%p815) target = $region44
        $region43: #{tpu_custom_call.1} parent=39 // pred_region
          %s818 = smul.u32 4, %s23
          %s820 = ssub.s32 512, 512
          %821 = vsyncadd %s811, %s820
          %s822 = smul.addr %s24, 8
          %s823 = sadd.s32 %s818, %s822
          %s824 = smul.addr %s823, 128
          %s825 = scalar_lea.hbm %s5, %s824
          %s827 = sshll.u32 %s814, 4
          %s828 = int_to_ptr.vmem [resolvable:$true] %s827
          %830 = dma.vmem_to_hbm [thread:$0]  %s828, 512, %s825, %s811
        $region44: #{tpu_custom_call.1} parent=39 // pred_fallthru
          _
      $region40: #{tpu_custom_call.1} parent=5 // pred_fallthru
        _
      %p831 = scmp.le.s32.totalorder 2, %s14
      // Predicated region
      $region45: #{tpu_custom_call.1} parent=5 // pred_check
        %p832 = pneg %p831
      $region46: #{tpu_custom_call.1} parent=5 // pred_check_branch
        %834 = sbr.rel (%p832) target = $region48
      $region47: #{tpu_custom_call.1} parent=5 // pred_region
        %s835 = ssub.s32 %s14, 2
        // Predicated region
        $region49: #{tpu_custom_call.1} parent=47 // pred_check
          %p836 = pneg %p187
        $region50: #{tpu_custom_call.1} parent=47 // pred_check_branch
          %838 = sbr.rel (%p836) target = $region52
        $region51: #{tpu_custom_call.1} parent=47 // pred_region
          %s839 = sand.u32 %s172, 1
          %s840 = scalar_lea.sflag [#allocation3], %s839
          %s841 = sand.u32 %s172, 1
          %s842 = smul.addr %s841, 32
          %s843 = scalar_lea.vmem [#allocation2], %s842
          %844 = dma.done %s840, 512
        $region52: #{tpu_custom_call.1} parent=47 // pred_fallthru
          _
      $region48: #{tpu_custom_call.1} parent=5 // pred_fallthru
        _
    $region6: #{tpu_custom_call.1} parent=1 // loop_footer
      %s18 = sadd.s32 1, %s14
    $region7: #{tpu_custom_call.1} parent=1 // loop_footer_branch
      %13 = sbr.rel target = $region3
    $region8: #{tpu_custom_call.1} parent=1 // loop_exit
      _
    %845 = vsyncpa [#allocation3], 1
    %s846 = scalar_lea.sflag [#allocation3], 1
    %847 = vsyncpa %s846, 1

</llo_original>
